<compile_context>
chip_gen: v6e
topology: v6e:2x2x1
jax: 0.10.0
libtpu: 0.0.40
codegen_flags: <defaults>
</compile_context>

<pallas_src>
import jax
import jax.numpy as jnp
from jax.experimental import pallas as pl
from jax.experimental.pallas import tpu as pltpu


def _resolve_view_shape(numel, shape):
    """Replicate torch.Tensor.view shape resolution (including a single -1)."""
    shape = list(shape)
    neg = [i for i, s in enumerate(shape) if s == -1]
    if len(neg) > 1:
        raise ValueError("only one dimension can be -1")
    known = 1
    for s in shape:
        if s != -1:
            known *= s
    if neg:
        if known == 0 or numel % known != 0:
            raise ValueError(f"cannot view {numel} elements as {shape}")
        shape[neg[0]] = numel // known
    else:
        if known != numel:
            raise ValueError(f"cannot view {numel} elements as {shape}")
    return tuple(shape)


def _dma_copy_kernel(x_hbm_ref, o_hbm_ref):
    # Whole-array HBM -> HBM DMA.  No grid, no VMEM staging, no TensorCore
    # compute: the DMA engine streams the bytes at HBM rate.
    def body(sem):
        cp = pltpu.make_async_copy(x_hbm_ref, o_hbm_ref, sem)
        cp.start()
        cp.wait()

    pl.run_scoped(body, pltpu.SemaphoreType.DMA)


def view_pallas(x, shape, *, materialize=False):
    """Equivalent of View(shape)(x) == x.view(*shape).

    Default (materialize=False): metadata-only reshape, zero data movement —
    matches torch .view semantics on a contiguous tensor exactly.

    materialize=True: returns a fresh physical HBM buffer, produced by a
    single HBM->HBM DMA inside a Pallas kernel (no VMEM round-trip).
    """
    numel = x.size
    out_shape = _resolve_view_shape(numel, shape)

    if not materialize or numel == 0:
        # A view is free; empty tensors have nothing to copy.
        return x.reshape(out_shape)

    # Metadata-only reshape on the source; the kernel copies it verbatim into
    # a brand-new buffer of the target shape.
    src = x.reshape(out_shape)
    itemsize = jnp.dtype(x.dtype).itemsize

    return pl.pallas_call(
        _dma_copy_kernel,
        out_shape=jax.ShapeDtypeStruct(out_shape, x.dtype),
        in_specs=[pl.BlockSpec(memory_space=pl.ANY)],
        out_specs=pl.BlockSpec(memory_space=pl.ANY),
        # Pure memory traffic: read numel*itemsize, write numel*itemsize.
        cost_estimate=pl.CostEstimate(
            flops=0, transcendentals=0, bytes_accessed=2 * numel * itemsize
        ),
    )(src)


if __name__ == "__main__":
    key = jax.random.PRNGKey(0)
    # Small input consistent with a typical conv feature map: NCHW (2, 4, 16, 16)
    x = jax.random.normal(key, (2, 4, 16, 16), dtype=jnp.float32)

    # View module configured like a flatten-per-batch: shape = (2, -1)
    target_shape = (2, -1)
    ref = x.reshape(2, -1)

    # 1) Default fast path: metadata-only view (zero HBM traffic).
    y_fast = jax.block_until_ready(view_pallas(x, target_shape))
    assert y_fast.shape == ref.shape, (y_fast.shape, ref.shape)
    assert y_fast.dtype == ref.dtype
    assert bool(jnp.array_equal(y_fast, ref))

    # 2) Materializing path: exercises the Pallas HBM->HBM DMA copy kernel.
    y_copy = jax.block_until_ready(view_pallas(x, target_shape, materialize=True))
    assert y_copy.shape == ref.shape, (y_copy.shape, ref.shape)
    assert y_copy.dtype == ref.dtype
    assert bool(jnp.array_equal(y_copy, ref))

    # 3) Materializing path with an element count that is NOT a multiple of
    #    128 (previous version silently fell back to a reshape here).
    x_odd = jax.random.normal(jax.random.PRNGKey(1), (3, 5, 7), dtype=jnp.float32)
    ref_odd = x_odd.reshape(-1)
    y_odd = jax.block_until_ready(view_pallas(x_odd, (-1,), materialize=True))
    assert y_odd.shape == ref_odd.shape, (y_odd.shape, ref_odd.shape)
    assert bool(jnp.array_equal(y_odd, ref_odd))

    print("KERNEL_OK")
</pallas_src>

<mosaic_0001>
module attributes {stable_mosaic.version = 11 : i64} {
  func.func @_dma_copy_kernel(%arg0: memref<2x1024xf32, #tpu.memory_space<any>>, %arg1: memref<2x1024xf32, #tpu.memory_space<any>>) attributes {dimension_semantics = [], scalar_prefetch = 0 : i64, scratch_operands = 0 : i64, tpu.core_type = #tpu.core_type<tc>} {
    "tpu.region"() ({
      %0 = tpu.sem_alloc : memref<!tpu.dma_semaphore, #tpu.memory_space<semaphore_mem>>
      tpu.enqueue_dma source(%arg0 : memref<2x1024xf32, #tpu.memory_space<any>>) target(%arg1 : memref<2x1024xf32, #tpu.memory_space<any>>) target_semaphore(%0 : memref<!tpu.dma_semaphore, #tpu.memory_space<semaphore_mem>>)
      tpu.wait_dma2 semaphore(%0 : memref<!tpu.dma_semaphore, #tpu.memory_space<semaphore_mem>>) src(%arg0 : memref<2x1024xf32, #tpu.memory_space<any>>) dst(%arg1 : memref<2x1024xf32, #tpu.memory_space<any>>)
      tpu.yield
    }) : () -> ()
    return
  }
}

</mosaic_0001>

<llo_original>
// kernel: tpu_custom_call.1
$region0: #{tpu_custom_call.1}
  #allocation0 [shape = 'u32[]', space=smem, size = 0x4, offset = 0x4, fixed_abs, tag = 'smem constant byte address 0x4 - core index']
  #allocation1 [shape = 'u32[144,128]{1,0:T(1,128)}', space=vmem, size = 0x12000, scoped, tag = 'internal scratch']
  #allocation3 [shape = 's32[]', space=sflag, size = 0x4, offset = 0, fixed_abs, tag = 'sflag constant byte address 0x0 - dummy sync flag']
  #allocation4 [shape = 'u32[0]{0}', space=smem, size = 0, offset = 0, fixed_abs, tag = 'smem constant byte address 0x0 - null']
  %s0 = inlined_call_operand.hbm [shape: f32[2,1024], index: 0, kind: input, shape index: {}]
  %s1 = inlined_call_operand.hbm [shape: f32[2,1024], index: 1, kind: output, shape index: {}]
  %s2 = sld [smem:[#allocation0]]
  $region3: #{tpu_custom_call.1} parent=0
    _
  %s4 = ssub.s32 1, %s2
  %s5 = scalar_select 0, %s4, %s2
  $region2: #{tpu_custom_call.1} parent=0
    #allocation2 [shape = 's32[1]{0}', space=sflag, size = 0x4, scoped, tag = 'scoped memory for tpu_custom_call.1']
    %s7 = sshll.u32 1, 14
    %s8 = sxor.u32 4294967295, %s7
    %12 = dma.general %s0, 256, %s1, [#allocation2], 131072, [#allocation4], 0, 0
    %s13 = smul.u32 2, 1
    %s14 = smul.u32 %s13, 8
    %s15 = sshll.u32 %s14, 4
    %16 = dma.done [#allocation2], %s15

</llo_original>
